<compile_context>
chip_gen: v6e
topology: v6e:2x2x1
jax: 0.10.0
libtpu: 0.0.40
codegen_flags: <defaults>
</compile_context>

<pallas_src>
import functools

import jax
import jax.numpy as jnp
from jax.experimental import pallas as pl
from jax.experimental.pallas import tpu as pltpu


def _round_up(x, m):
    return ((x + m - 1) // m) * m


def attention_kernel(x_ref, w_ref, o_ref, m_ref, l_ref, acc_ref, *, ts, s_valid):
    # x_ref: (TB, TS, H) block; w_ref: (1, 1, H) f32 weight row
    # o_ref: (TB, H) output block
    # m_ref/l_ref: (TB, 1) f32 running max / denom; acc_ref: (TB, H) f32 acc
    ks = pl.program_id(1)
    ns = pl.num_programs(1)

    @pl.when(ks == 0)
    def _init():
        m_ref[...] = jnp.full(m_ref.shape, -jnp.inf, dtype=m_ref.dtype)
        l_ref[...] = jnp.zeros(l_ref.shape, dtype=l_ref.dtype)
        acc_ref[...] = jnp.zeros(acc_ref.shape, dtype=acc_ref.dtype)

    w = w_ref[...].astype(jnp.float32)                       # (1, 1, H)

    # Pass 1: logits for this sequence block (f32 accumulation; the f32 view
    # of x is not kept live across passes - x_ref is re-read below).
    scores = jnp.sum(x_ref[...].astype(jnp.float32) * w,
                     axis=-1, keepdims=True)                 # (TB, TS, 1)

    if s_valid % ts != 0:
        # Static branch: only emitted when the sequence was zero-padded; mask
        # padded positions out of the softmax (their x rows are exactly 0).
        seq = ks * ts + jax.lax.broadcasted_iota(jnp.int32, scores.shape, 1)
        scores = jnp.where(seq < s_valid, scores, -jnp.inf)

    # Online-softmax update over the sequence axis.
    m_prev = m_ref[...]                                      # (TB, 1)
    m_blk = jnp.max(scores, axis=1)                          # (TB, 1)
    m_new = jnp.maximum(m_prev, m_blk)
    alpha = jnp.exp(m_prev - m_new)                          # (TB, 1)
    e = jnp.exp(scores - m_new[:, None, :])                  # (TB, TS, 1)

    # Pass 2: un-normalized weighted partial sum, re-reading the VMEM block.
    part = jnp.sum(e * x_ref[...].astype(jnp.float32), axis=1)   # (TB, H) f32

    l_ref[...] = alpha * l_ref[...] + jnp.sum(e, axis=1)
    acc_ref[...] = alpha * acc_ref[...] + part
    m_ref[...] = m_new

    @pl.when(ks == ns - 1)
    def _finalize():
        denom = l_ref[...]                                   # (TB, 1)
        inv = pl.reciprocal(denom, approx=True)              # EUP vrcp
        inv = inv * (2.0 - denom * inv)                      # 1 NR step -> ~f32
        o_ref[...] = (acc_ref[...] * inv).astype(o_ref.dtype)


@jax.jit
def attention_layer(rnn_output, weight, bias=None):
    """rnn_output: (B, S, H); weight: (1, H) (nn.Linear layout); bias: (1,).

    The bias is accepted for API parity but unused: a constant added before a
    softmax over the sequence axis cancels exactly.
    """
    del bias
    B, S, H = rnn_output.shape
    dtype = rnn_output.dtype
    itemsize = jnp.dtype(dtype).itemsize

    # ---- hardware-aware VMEM budget (v5e/v6e: 128 MiB, v7x: 64 MiB) -------
    try:
        phys_vmem = int(getattr(pltpu.get_tpu_info(),
                                "vmem_capacity_bytes", 64 << 20))
    except Exception:
        phys_vmem = 64 << 20            # conservative default (v7x per-core)
    vmem_budget = max((phys_vmem * 3) // 4, phys_vmem - (32 << 20))

    # ---- corrected per-block VMEM accounting -------------------------------
    sub = max(8, 32 // itemsize)        # sublane packing: f32->8, bf16->16
    h_lane = _round_up(H, 128)          # lane padding of the last dim

    def block_vmem_bytes(tb, ts_):
        s_in = _round_up(ts_, sub)
        s_f32 = _round_up(ts_, 8)
        in_bytes = 2 * tb * s_in * h_lane * itemsize          # dbl-buf input
        tmp_bytes = 2 * tb * s_f32 * h_lane * 4               # f32 elemwise temps
        small = 3 * tb * s_f32 * 128 * 4                      # (TB,TS,1) score/exp
        out_bytes = 2 * tb * h_lane * itemsize                # dbl-buf output
        scratch = tb * h_lane * 4 + 2 * tb * 128 * 4          # acc + m + l
        return in_bytes + tmp_bytes + small + out_bytes + scratch + h_lane * 4

    # ---- sequence tile: full S when it fits, else flash-tile over S --------
    ts = S
    if block_vmem_bytes(8, ts) > vmem_budget:
        ts = _round_up(S, sub)
        while ts > sub and block_vmem_bytes(8, ts) > vmem_budget:
            ts = max(sub, _round_up(ts // 2, sub))
    if ts >= S:
        ts = S
        grid_s = 1
        s_total = S
    else:
        grid_s = pl.cdiv(S, ts)
        s_total = grid_s * ts           # pad sequence with zero rows (masked)

    # ---- batch tile: ~4 MiB input blocks, >=2 grid steps for v7x megacore --
    row_bytes = max(1, block_vmem_bytes(1, ts))
    tb_max = max(1, vmem_budget // row_bytes)
    in_row_bytes = max(1, _round_up(ts, sub) * h_lane * itemsize)
    tb_target = max(8, (4 << 20) // in_row_bytes)
    tb = max(1, min(tb_target, tb_max))

    if B < 8:
        tb = B
    else:
        tb = min(tb, _round_up(B, 8))
        if B >= 16 and pl.cdiv(B, tb) < 2:
            tb = _round_up(pl.cdiv(B, 2), 8)     # keep 2+ steps on the batch axis
        tb = max(8, (tb // 8) * 8)
        if B % tb != 0:
            # Prefer a nearby tile that divides B: avoids padding the batch.
            for cand in range(tb, max(8, tb // 2) - 1, -8):
                if B % cand == 0:
                    tb = cand
                    break

    grid_b = pl.cdiv(B, tb)
    b_pad = grid_b * tb

    # ---- pad (rare paths only); padded rows are zero and harmless ----------
    x = rnn_output
    if b_pad != B or s_total != S:
        x = jnp.pad(x, ((0, b_pad - B), (0, s_total - S), (0, 0)))

    w_row = weight.reshape(1, 1, H).astype(jnp.float32)

    need = block_vmem_bytes(tb, ts)
    vmem_limit = int(min(vmem_budget, max(need + need // 2, 32 << 20)))

    kernel = functools.partial(attention_kernel, ts=ts, s_valid=S)

    out = pl.pallas_call(
        kernel,
        out_shape=jax.ShapeDtypeStruct((b_pad, H), dtype),
        grid_spec=pltpu.PrefetchScalarGridSpec(
            num_scalar_prefetch=0,
            grid=(grid_b, grid_s),
            in_specs=[
                pl.BlockSpec((tb, ts, H), lambda i, k: (i, k, 0)),   # batch slab
                pl.BlockSpec((1, 1, H), lambda i, k: (0, 0, 0)),     # weight row
            ],
            out_specs=pl.BlockSpec((tb, H), lambda i, k: (i, 0)),
            scratch_shapes=[
                pltpu.VMEM((tb, 1), jnp.float32),    # running max m
                pltpu.VMEM((tb, 1), jnp.float32),    # running denom l
                pltpu.VMEM((tb, H), jnp.float32),    # running weighted sum
            ],
        ),
        compiler_params=pltpu.CompilerParams(
            dimension_semantics=("parallel", "arbitrary"),
            vmem_limit_bytes=vmem_limit,
        ),
    )(x, w_row)
    return out[:B] if b_pad != B else out


def attention_layer_ref(rnn_output, weight, bias):
    """Pure-JAX reference mirroring the PyTorch forward (bias included)."""
    logits = jnp.einsum("bsh,oh->bso", rnn_output, weight) + bias  # (B, S, 1)
    attn = jax.nn.softmax(logits, axis=1)
    return jnp.sum(attn * rnn_output, axis=1)                      # (B, H)


if __name__ == "__main__":
    # Small shapes consistent with the module; B=16 gives a 2-step batch grid.
    B, S, H = 16, 8, 32

    key = jax.random.PRNGKey(0)
    k_x, k_w, k_b = jax.random.split(key, 3)

    rnn_output = jax.random.normal(k_x, (B, S, H), dtype=jnp.float32)
    # nn.Linear(hidden_size, 1): weight (1, H), bias (1,)
    weight = jax.random.normal(k_w, (1, H), dtype=jnp.float32) * 0.1
    bias = jax.random.normal(k_b, (1,), dtype=jnp.float32) * 0.1

    out = attention_layer(rnn_output, weight, bias)
    out = jax.block_until_ready(out)

    ref = attention_layer_ref(rnn_output, weight, bias)
    assert out.shape == (B, H), out.shape
    max_err = float(jnp.max(jnp.abs(out - ref)))
    assert jnp.allclose(out, ref, atol=1e-4, rtol=1e-4), (
        f"mismatch vs reference: max abs err = {max_err}"
    )

    print("KERNEL_OK")
</pallas_src>

<mosaic_0001>
module attributes {stable_mosaic.version = 11 : i64} {
  func.func @attention_kernel(%arg0: i32, %arg1: i32, %arg2: memref<8x8x32xf32, #tpu.memory_space<vmem>>, %arg3: memref<1x1x32xf32, #tpu.memory_space<vmem>>, %arg4: memref<8x32xf32, #tpu.memory_space<vmem>>, %arg5: memref<8x1xf32, #tpu.memory_space<vmem>>, %arg6: memref<8x1xf32, #tpu.memory_space<vmem>>, %arg7: memref<8x32xf32, #tpu.memory_space<vmem>>) attributes {dimension_semantics = [#tpu.dimension_semantics<parallel>, #tpu.dimension_semantics<arbitrary>], iteration_bounds = array<i64: 2, 1>, scalar_prefetch = 0 : i64, scratch_operands = 3 : i64, tpu.core_type = #tpu.core_type<tc>, window_params = [{transform_indices = @transform_0, window_bounds = array<i64: 8, 8, 32>}, {pipeline_mode = #tpu.pipeline_mode<synchronous>, transform_indices = @transform_1, window_bounds = array<i64: 1, 1, 32>}, {transform_indices = @transform_2, window_bounds = array<i64: 8, 32>}]} {
    %c0_i32 = arith.constant 0 : i32
    %0 = arith.cmpi eq, %arg1, %c0_i32 : i32
    %1 = arith.extui %0 : i1 to i32
    %c0_i32_0 = arith.constant 0 : i32
    %2 = arith.cmpi ne, %1, %c0_i32_0 : i32
    scf.if %2 {
      %cst_26 = arith.constant 0xFF800000 : f32
      %36 = vector.broadcast %cst_26 : f32 to vector<8x1xf32>
      %c0_27 = arith.constant 0 : index
      %c0_28 = arith.constant 0 : index
      %37 = vector.load %arg5[%c0_27, %c0_28] : memref<8x1xf32, #tpu.memory_space<vmem>>, vector<8x1xf32>
      tpu.vector_store %arg5[%c0_27, %c0_28], %36 {strides = array<i32>} : memref<8x1xf32, #tpu.memory_space<vmem>>, vector<8x1xf32>,
      %cst_29 = arith.constant 0.000000e+00 : f32
      %38 = vector.broadcast %cst_29 : f32 to vector<8x1xf32>
      %c0_30 = arith.constant 0 : index
      %c0_31 = arith.constant 0 : index
      %39 = vector.load %arg6[%c0_30, %c0_31] : memref<8x1xf32, #tpu.memory_space<vmem>>, vector<8x1xf32>
      tpu.vector_store %arg6[%c0_30, %c0_31], %38 {strides = array<i32>} : memref<8x1xf32, #tpu.memory_space<vmem>>, vector<8x1xf32>,
      %cst_32 = arith.constant 0.000000e+00 : f32
      %40 = vector.broadcast %cst_32 : f32 to vector<8x32xf32>
      %c0_33 = arith.constant 0 : index
      %c0_34 = arith.constant 0 : index
      %41 = vector.load %arg7[%c0_33, %c0_34] : memref<8x32xf32, #tpu.memory_space<vmem>>, vector<8x32xf32>
      tpu.vector_store %arg7[%c0_33, %c0_34], %40 {strides = array<i32>} : memref<8x32xf32, #tpu.memory_space<vmem>>, vector<8x32xf32>,
    } else {
    }
    %c0 = arith.constant 0 : index
    %c0_1 = arith.constant 0 : index
    %c0_2 = arith.constant 0 : index
    %3 = vector.load %arg3[%c0, %c0_1, %c0_2] : memref<1x1x32xf32, #tpu.memory_space<vmem>>, vector<1x1x32xf32>
    %c0_3 = arith.constant 0 : index
    %c0_4 = arith.constant 0 : index
    %c0_5 = arith.constant 0 : index
    %4 = vector.load %arg2[%c0_3, %c0_4, %c0_5] : memref<8x8x32xf32, #tpu.memory_space<vmem>>, vector<8x8x32xf32>
    %5 = vector.broadcast %3 : vector<1x1x32xf32> to vector<8x8x32xf32>
    %6 = arith.mulf %4, %5 : vector<8x8x32xf32>
    %cst = arith.constant dense<0.000000e+00> : vector<8x8xf32>
    %7 = vector.multi_reduction <add>, %6, %cst [2] : vector<8x8x32xf32> to vector<8x8xf32>
    %8 = vector.shape_cast %7 : vector<8x8xf32> to vector<8x8x1xf32>
    %c0_6 = arith.constant 0 : index
    %c0_7 = arith.constant 0 : index
    %9 = vector.load %arg5[%c0_6, %c0_7] : memref<8x1xf32, #tpu.memory_space<vmem>>, vector<8x1xf32>
    %cst_8 = arith.constant dense<0xFF800000> : vector<8x1xf32>
    %10 = vector.multi_reduction <maximumf>, %8, %cst_8 [1] : vector<8x8x1xf32> to vector<8x1xf32>
    %11 = arith.maximumf %9, %10 : vector<8x1xf32>
    %12 = arith.subf %9, %11 : vector<8x1xf32>
    %13 = math.exp %12 : vector<8x1xf32>
    %14 = vector.shape_cast %11 : vector<8x1xf32> to vector<8x1x1xf32>
    %15 = vector.broadcast %14 : vector<8x1x1xf32> to vector<8x8x1xf32>
    %16 = arith.subf %8, %15 : vector<8x8x1xf32>
    %17 = math.exp %16 : vector<8x8x1xf32>
    %c0_9 = arith.constant 0 : index
    %c0_10 = arith.constant 0 : index
    %c0_11 = arith.constant 0 : index
    %18 = vector.load %arg2[%c0_9, %c0_10, %c0_11] : memref<8x8x32xf32, #tpu.memory_space<vmem>>, vector<8x8x32xf32>
    %19 = vector.broadcast %17 : vector<8x8x1xf32> to vector<8x8x32xf32>
    %20 = arith.mulf %19, %18 : vector<8x8x32xf32>
    %cst_12 = arith.constant dense<0.000000e+00> : vector<8x32xf32>
    %21 = vector.multi_reduction <add>, %20, %cst_12 [1] : vector<8x8x32xf32> to vector<8x32xf32>
    %c0_13 = arith.constant 0 : index
    %c0_14 = arith.constant 0 : index
    %22 = vector.load %arg6[%c0_13, %c0_14] : memref<8x1xf32, #tpu.memory_space<vmem>>, vector<8x1xf32>
    %23 = arith.mulf %13, %22 : vector<8x1xf32>
    %cst_15 = arith.constant dense<0.000000e+00> : vector<8x1xf32>
    %24 = vector.multi_reduction <add>, %17, %cst_15 [1] : vector<8x8x1xf32> to vector<8x1xf32>
    %25 = arith.addf %23, %24 : vector<8x1xf32>
    %c0_16 = arith.constant 0 : index
    %c0_17 = arith.constant 0 : index
    %26 = vector.load %arg6[%c0_16, %c0_17] : memref<8x1xf32, #tpu.memory_space<vmem>>, vector<8x1xf32>
    tpu.vector_store %arg6[%c0_16, %c0_17], %25 {strides = array<i32>} : memref<8x1xf32, #tpu.memory_space<vmem>>, vector<8x1xf32>,
    %c0_18 = arith.constant 0 : index
    %c0_19 = arith.constant 0 : index
    %27 = vector.load %arg7[%c0_18, %c0_19] : memref<8x32xf32, #tpu.memory_space<vmem>>, vector<8x32xf32>
    %28 = vector.broadcast %13 : vector<8x1xf32> to vector<8x32xf32>
    %29 = arith.mulf %28, %27 : vector<8x32xf32>
    %30 = arith.addf %29, %21 : vector<8x32xf32>
    %c0_20 = arith.constant 0 : index
    %c0_21 = arith.constant 0 : index
    %31 = vector.load %arg7[%c0_20, %c0_21] : memref<8x32xf32, #tpu.memory_space<vmem>>, vector<8x32xf32>
    tpu.vector_store %arg7[%c0_20, %c0_21], %30 {strides = array<i32>} : memref<8x32xf32, #tpu.memory_space<vmem>>, vector<8x32xf32>,
    %c0_22 = arith.constant 0 : index
    %c0_23 = arith.constant 0 : index
    %32 = vector.load %arg5[%c0_22, %c0_23] : memref<8x1xf32, #tpu.memory_space<vmem>>, vector<8x1xf32>
    tpu.vector_store %arg5[%c0_22, %c0_23], %11 {strides = array<i32>} : memref<8x1xf32, #tpu.memory_space<vmem>>, vector<8x1xf32>,
    %c0_i32_24 = arith.constant 0 : i32
    %33 = arith.cmpi eq, %arg1, %c0_i32_24 : i32
    %34 = arith.extui %33 : i1 to i32
    %c0_i32_25 = arith.constant 0 : i32
    %35 = arith.cmpi ne, %34, %c0_i32_25 : i32
    scf.if %35 {
      %c0_26 = arith.constant 0 : index
      %c0_27 = arith.constant 0 : index
      %36 = vector.load %arg6[%c0_26, %c0_27] : memref<8x1xf32, #tpu.memory_space<vmem>>, vector<8x1xf32>
      %37 = tpu.reciprocal %36 {approx = true} : vector<8x1xf32> -> vector<8x1xf32>
      %38 = arith.mulf %36, %37 : vector<8x1xf32>
      %cst_28 = arith.constant 2.000000e+00 : f32
      %39 = vector.broadcast %cst_28 : f32 to vector<8x1xf32>
      %40 = arith.subf %39, %38 : vector<8x1xf32>
      %41 = arith.mulf %37, %40 : vector<8x1xf32>
      %c0_29 = arith.constant 0 : index
      %c0_30 = arith.constant 0 : index
      %42 = vector.load %arg7[%c0_29, %c0_30] : memref<8x32xf32, #tpu.memory_space<vmem>>, vector<8x32xf32>
      %43 = vector.broadcast %41 : vector<8x1xf32> to vector<8x32xf32>
      %44 = arith.mulf %42, %43 : vector<8x32xf32>
      %c0_31 = arith.constant 0 : index
      %c0_32 = arith.constant 0 : index
      %45 = vector.load %arg4[%c0_31, %c0_32] : memref<8x32xf32, #tpu.memory_space<vmem>>, vector<8x32xf32>
      tpu.vector_store %arg4[%c0_31, %c0_32], %44 {strides = array<i32>} : memref<8x32xf32, #tpu.memory_space<vmem>>, vector<8x32xf32>,
    } else {
    }
    return
  }
  func.func @transform_0(%arg0: i32, %arg1: i32) -> (i32, i32, i32) {
    %c0_i32 = arith.constant 0 : i32
    %c0_i32_0 = arith.constant 0 : i32
    return %arg0, %arg1, %c0_i32 : i32, i32, i32
  }
  func.func @transform_1(%arg0: i32, %arg1: i32) -> (i32, i32, i32) {
    %c0_i32 = arith.constant 0 : i32
    %c0_i32_0 = arith.constant 0 : i32
    %c0_i32_1 = arith.constant 0 : i32
    %c0_i32_2 = arith.constant 0 : i32
    return %c0_i32, %c0_i32_0, %c0_i32_1 : i32, i32, i32
  }
  func.func @transform_2(%arg0: i32, %arg1: i32) -> (i32, i32) {
    %c0_i32 = arith.constant 0 : i32
    %c0_i32_0 = arith.constant 0 : i32
    return %arg0, %c0_i32 : i32, i32
  }
}

</mosaic_0001>

<llo_original>
// kernel: attention_layer.1
$region0: #{attention_layer.1}
  #allocation0 [shape = 'u32[]', space=smem, size = 0x4, offset = 0x4, fixed_abs, tag = 'smem constant byte address 0x4 - core index']
  #allocation1 [shape = 'u32[144,128]{1,0:T(1,128)}', space=vmem, size = 0x12000, scoped, tag = 'internal scratch']
  #allocation2 [shape = 'f32[8,1]{1,0:T(8,128)}', space=vmem, size = 0x1000, scoped, tag = 'scratch operand']
  #allocation3 [shape = 'f32[8,1]{1,0:T(8,128)}', space=vmem, size = 0x1000, scoped, tag = 'scratch operand']
  #allocation4 [shape = 'f32[8,32]{1,0:T(8,128)}', space=vmem, size = 0x1000, scoped, tag = 'scratch operand']
  %s0 = inlined_call_operand.hbm [shape: f32[16,8,32], index: 0, kind: input, shape index: {}]
  %s1 = inlined_call_operand.vmem [shape: f32[1,1,32], index: 1, kind: input, shape index: {}]
  %s2 = inlined_call_operand.hbm [shape: f32[16,32], index: 2, kind: output, shape index: {}]
  %s3 = sld [smem:[#allocation0]]
  $region53: #{attention_layer.1} parent=0
    _
  %s5 = ssub.s32 1, %s3
  %s6 = scalar_select 0, %s5, %s3
  $region1: #{attention_layer.1} parent=0
    #allocation5 [shape = 'u8[65536]{0}', space=vmem, size = 0x10000, scoped, tag = 'input window, operand 0']
    #allocation6 [shape = 's32[2]{0}', space=sflag, size = 0x8, scoped, tag = 'scoped memory for attention_layer.1']
    #allocation7 [shape = 's32[2]{0}', space=sflag, size = 0x8, scoped, tag = 'scoped memory for attention_layer.1']
    #allocation8 [shape = 'u8[8192]{0}', space=vmem, size = 0x2000, scoped, tag = 'output window, operand 0']
    %7 = vsyncpa [#allocation6], 0
    %s8 = scalar_lea.sflag [#allocation6], 1
    %9 = vsyncpa %s8, 0
    %10 = vsyncpa [#allocation7], 0
    %s11 = scalar_lea.sflag [#allocation7], 1
    %12 = vsyncpa %s11, 0
    loop: start=0, step=1, limit=4
    $region2: #{attention_layer.1} parent=1 // loop_pre_header
      _
    $region3: #{attention_layer.1} parent=1 // loop_header
      %s14 = sphi 0, %s18
      %p15 = scmp.ge.s32.totalorder %s14, 4
      %s21 = sphi 0, %s33
      %s22 = sphi 0, %s29
      %s23 = sphi 0, %s21
      %s24 = sphi 0, %s22
      %s25 = sphi 0, %s23
      %s26 = sphi 0, %s24
      %s38 = sphi 0, %s40
      %s41 = sphi 0, %s38
      %s42 = sphi 0, %s41
      %s58 = sphi 0, %s42
      %s62 = sphi 0, %s62
      %s64 = sphi 0, %s62
      %s65 = sphi 0, %s64
      %s79 = sphi 0, %s65
      %s85 = sphi 0, %s87
      %s88 = sphi 0, %s85
      %s89 = sphi 0, %s88
      %s105 = sphi 0, %s89
    $region4: #{attention_layer.1} parent=1 // loop_header_branch
      %17 = sbr.rel (%p15) target = $region8
    $region5: #{attention_layer.1} parent=1 // loop_body
      %s19 = ssub.s32 %s14, 1
      %s20 = ssub.s32 %s14, 2
      %s27 = sadd.s32 1, %s22
      %p28 = scmp.ge.s32.totalorder %s27, 1
      %s29 = scalar_select %p28, 0, %s27
      %s30 = sadd.s32 1, %s21
      %s31 = scalar_select %p28, %s30, %s21
      %p32 = scmp.ge.s32.totalorder %s31, 2
      %s33 = scalar_select %p32, 0, %s31
      %s34 = ssub.s32 %s21, %s33
      %s35 = ssub.s32 %s22, %s29
      %s36 = sor.u32 %s34, %s35
      %p37 = scmp.eq.s32.totalorder %s36, 0
      %s39 = sadd.s32 %s38, 1
      %s40 = scalar_select %p37, %s38, %s39
      %p43 = pneg %p37
      %p44 = scmp.eq.s32.totalorder %s14, 1
      %p45 = por %p43, %p44
      %p46 = scmp.ne.s32.totalorder %s38, %s41
      %p47 = scmp.eq.s32.totalorder %s14, 0
      %p48 = por %p46, %p47
      %p49 = scmp.ne.s32.totalorder %s38, %s41
      %p50 = scmp.eq.s32.totalorder %s19, 1
      %p51 = por %p49, %p50
      %p52 = scmp.ne.s32.totalorder %s41, %s42
      %p53 = scmp.eq.s32.totalorder %s19, 0
      %p54 = por %p52, %p53
      %p55 = scmp.ne.s32.totalorder %s41, %s42
      %p56 = scmp.eq.s32.totalorder %s20, 1
      %p57 = por %p55, %p56
      %p59 = scmp.ne.s32.totalorder %s42, %s58
      %p60 = scmp.eq.s32.totalorder %s20, 0
      %p61 = por %p59, %p60
      %s63 = sadd.s32 %s62, 1
      %p66 = scmp.eq.s32.totalorder %s14, 1
      %p67 = scmp.ne.s32.totalorder %s62, %s64
      %p68 = scmp.eq.s32.totalorder %s14, 0
      %p69 = por %p67, %p68
      %p70 = scmp.ne.s32.totalorder %s62, %s64
      %p71 = scmp.eq.s32.totalorder %s19, 1
      %p72 = por %p70, %p71
      %p73 = scmp.ne.s32.totalorder %s64, %s65
      %p74 = scmp.eq.s32.totalorder %s19, 0
      %p75 = por %p73, %p74
      %p76 = scmp.ne.s32.totalorder %s64, %s65
      %p77 = scmp.eq.s32.totalorder %s20, 1
      %p78 = por %p76, %p77
      %p80 = scmp.ne.s32.totalorder %s65, %s79
      %p81 = scmp.eq.s32.totalorder %s20, 0
      %p82 = por %p80, %p81
      %s83 = ssub.s32 %s21, %s33
      %p84 = scmp.eq.s32.totalorder %s83, 0
      %s86 = sadd.s32 %s85, 1
      %s87 = scalar_select %p84, %s85, %s86
      %p90 = pneg %p84
      %p91 = scmp.eq.s32.totalorder %s14, 1
      %p92 = por %p90, %p91
      %p93 = scmp.ne.s32.totalorder %s85, %s88
      %p94 = scmp.eq.s32.totalorder %s14, 0
      %p95 = por %p93, %p94
      %p96 = scmp.ne.s32.totalorder %s85, %s88
      %p97 = scmp.eq.s32.totalorder %s19, 1
      %p98 = por %p96, %p97
      %p99 = scmp.ne.s32.totalorder %s88, %s89
      %p100 = scmp.eq.s32.totalorder %s19, 0
      %p101 = por %p99, %p100
      %p102 = scmp.ne.s32.totalorder %s88, %s89
      %p103 = scmp.eq.s32.totalorder %s20, 1
      %p104 = por %p102, %p103
      %p106 = scmp.ne.s32.totalorder %s89, %s105
      %p107 = scmp.eq.s32.totalorder %s20, 0
      %p108 = por %p106, %p107
      %p109 = scmp.le.s32.totalorder 1, %s14
      %p110 = scmp.lt.s32.totalorder %s14, 3
      %p111 = pnand %p109, %p110
      %p112 = pneg %p111
      // Predicated region
      $region9: #{attention_layer.1} parent=5 // pred_check
        _
      $region10: #{attention_layer.1} parent=5 // pred_check_branch
        %114 = sbr.rel (%p111) target = $region12
      $region11: #{attention_layer.1} parent=5 // pred_region
        %s115 = ssub.s32 %s14, 1
        // Predicated region
        $region13: #{attention_layer.1} parent=11 // pred_check
          %p116 = pneg %p75
        $region14: #{attention_layer.1} parent=11 // pred_check_branch
          %118 = sbr.rel (%p116) target = $region16
        $region15: #{attention_layer.1} parent=11 // pred_region
          _
        $region16: #{attention_layer.1} parent=11 // pred_fallthru
          _
      $region12: #{attention_layer.1} parent=5 // pred_fallthru
        _
      %p119 = scmp.lt.s32.totalorder %s14, 2
      // Predicated region
      $region17: #{attention_layer.1} parent=5 // pred_check
        %p120 = pneg %p119
      $region18: #{attention_layer.1} parent=5 // pred_check_branch
        %122 = sbr.rel (%p120) target = $region20
      $region19: #{attention_layer.1} parent=5 // pred_region
        // Predicated region
        $region21: #{attention_layer.1} parent=19 // pred_check
          %p123 = pneg %p48
        $region22: #{attention_layer.1} parent=19 // pred_check_branch
          %125 = sbr.rel (%p123) target = $region24
        $region23: #{attention_layer.1} parent=19 // pred_region
          %s126 = sand.u32 %s38, 1
          %s127 = scalar_lea.sflag [#allocation6], %s126
          %s128 = sand.u32 %s38, 1
          %s129 = smul.addr %s128, 64
          %s130 = scalar_lea.vmem [#allocation5], %s129
          %s131 = smul.u32 8, %s21
          %s133 = ssub.s32 1024, 1024
          %134 = vsyncadd %s127, %s133
          %s135 = sadd.s32 %s22, %s131
          %s136 = smul.addr %s135, 128
          %s137 = scalar_lea.hbm %s0, %s136
          %s138 = sshll.u32 %s130, 4
          %s139 = int_to_ptr.vmem [resolvable:$true] %s138
          %144 = dma.hbm_to_vmem [thread:$0]  %s137, 1024, %s139, %s127, 128, 128, 8
        $region24: #{attention_layer.1} parent=19 // pred_fallthru
          _
      $region20: #{attention_layer.1} parent=5 // pred_fallthru
        _
      %p145 = scmp.le.s32.totalorder 1, %s14
      %p146 = scmp.lt.s32.totalorder %s14, 3
      %p147 = pnand %p145, %p146
      %p148 = pneg %p147
      // Predicated region
      $region25: #{attention_layer.1} parent=5 // pred_check
        _
      $region26: #{attention_layer.1} parent=5 // pred_check_branch
        %150 = sbr.rel (%p147) target = $region28
      $region27: #{attention_layer.1} parent=5 // pred_region
        %s151 = ssub.s32 %s14, 1
        %s152 = sand.u32 %s41, 1
        %s153 = scalar_lea.sflag [#allocation6], %s152
        %s154 = sand.u32 %s41, 1
        %s155 = smul.addr %s154, 64
        %s156 = scalar_lea.vmem [#allocation5], %s155
        // Predicated region
        $region29: #{attention_layer.1} parent=27 // pred_check
          %p157 = pneg %p54
        $region30: #{attention_layer.1} parent=27 // pred_check_branch
          %159 = sbr.rel (%p157) target = $region32
        $region31: #{attention_layer.1} parent=27 // pred_region
          %160 = dma.done %s153, 1024
        $region32: #{attention_layer.1} parent=27 // pred_fallthru
          _
        %s161 = sand.u32 %s41, 1
        %s162 = scalar_lea.sflag [#allocation6], %s161
        %s163 = sand.u32 %s41, 1
        %s164 = smul.addr %s163, 64
        %s165 = scalar_lea.vmem [#allocation5], %s164
        %p166 = pneg %p54
        %p167 = pneg %p51
        %p168 = pneg %p75
        %p169 = pneg %p72
        %p170 = pneg %p101
        %p171 = pneg %p98
        %s172 = sand.u32 %s88, 1
        %s173 = scalar_lea.sflag [#allocation7], %s172
        %s174 = sand.u32 %s88, 1
        %s175 = smul.addr %s174, 8
        %s176 = scalar_lea.vmem [#allocation8], %s175
        %s177 = smul.u32 8, %s23
        %p178 = scmp.eq.s32.totalorder %s24, 0
        // Predicated region
        $region33: #{attention_layer.1} parent=27 // pred_check
          %p179 = pneg %p178
        $region34: #{attention_layer.1} parent=27 // pred_check_branch
          %181 = sbr.rel (%p179) target = $region36
        $region35: #{attention_layer.1} parent=27 // pred_region
          %vm182 = vcmask 7168
          %183 = vst.msk [vmem:[#allocation2] sm:$0xff] %vm182, -inf
          %184 = vst.msk [vmem:[#allocation3] sm:$0xff] %vm182, 0.0
          %vm185 = vcmask 261120
          %186 = vst.msk [vmem:[#allocation4] sm:$0xff] %vm185, 0.0
        $region36: #{attention_layer.1} parent=27 // pred_fallthru
          _
        %v187 = vld [vmem:[%s1] sm:$0x1]
        %v188 = vld [vmem:[%s156] sm:$0xff]
        %v189 = vld [vmem:[%s156 + $0x8] sm:$0xff]
        %v190 = vld [vmem:[%s156 + $0x10] sm:$0xff]
        %v191 = vld [vmem:[%s156 + $0x18] sm:$0xff]
        %v192 = vld [vmem:[%s156 + $0x20] sm:$0xff]
        %v193 = vld [vmem:[%s156 + $0x28] sm:$0xff]
        %v194 = vld [vmem:[%s156 + $0x30] sm:$0xff]
        %v195 = vld [vmem:[%s156 + $0x38] sm:$0xff]
        %v197 = vlaneseq
        %v198 = vshrl.u32 %v197, 7
        %v199 = vsub.s32 0, %v198
        %v200 = vrot.slane %v187, %v199
        %v202 = vmul.f32 %v188, %v200
        %v203 = vmul.f32 %v189, %v200
        %v204 = vmul.f32 %v190, %v200
        %v205 = vmul.f32 %v191, %v200
        %v206 = vmul.f32 %v192, %v200
        %v207 = vmul.f32 %v193, %v200
        %v208 = vmul.f32 %v194, %v200
        %v209 = vmul.f32 %v195, %v200
        %vm210 = vcmask 261120
        %v211 = vsel %vm210, %v202, 0.0
        %212 = vadd.xlane.f32.xlu0 %v211
        %v213 = vpop.xlane.xlu0 %212
        %v214 = vsel %vm210, %v203, 0.0
        %215 = vadd.xlane.f32.xlu0 %v214
        %v216 = vpop.xlane.xlu0 %215
        %v217 = vsel %vm210, %v204, 0.0
        %218 = vadd.xlane.f32.xlu0 %v217
        %v219 = vpop.xlane.xlu0 %218
        %v220 = vsel %vm210, %v205, 0.0
        %221 = vadd.xlane.f32.xlu0 %v220
        %v222 = vpop.xlane.xlu0 %221
        %v223 = vsel %vm210, %v206, 0.0
        %224 = vadd.xlane.f32.xlu0 %v223
        %v225 = vpop.xlane.xlu0 %224
        %v226 = vsel %vm210, %v207, 0.0
        %227 = vadd.xlane.f32.xlu0 %v226
        %v228 = vpop.xlane.xlu0 %227
        %v229 = vsel %vm210, %v208, 0.0
        %230 = vadd.xlane.f32.xlu0 %v229
        %v231 = vpop.xlane.xlu0 %230
        %v232 = vsel %vm210, %v209, 0.0
        %233 = vadd.xlane.f32.xlu0 %v232
        %v234 = vpop.xlane.xlu0 %233
        %v235 = vld [vmem:[#allocation2] sm:$0xff]
        %v236 = vrot.slane %v213, 4
        %v237 = vmax.f32 %v213, %v236
        %v238 = vrot.slane %v237, 2
        %v239 = vmax.f32 %v237, %v238
        %v240 = vrot.slane %v239, 1
        %v241 = vmax.f32 %v239, %v240
        %v242 = vrot.slane %v216, 4
        %v243 = vmax.f32 %v216, %v242
        %v244 = vrot.slane %v243, 2
        %v245 = vmax.f32 %v243, %v244
        %v246 = vrot.slane %v245, 1
        %v247 = vmax.f32 %v245, %v246
        %v248 = vrot.slane %v219, 4
        %v249 = vmax.f32 %v219, %v248
        %v250 = vrot.slane %v249, 2
        %v251 = vmax.f32 %v249, %v250
        %v252 = vrot.slane %v251, 1
        %v253 = vmax.f32 %v251, %v252
        %v254 = vrot.slane %v222, 4
        %v255 = vmax.f32 %v222, %v254
        %v256 = vrot.slane %v255, 2
        %v257 = vmax.f32 %v255, %v256
        %v258 = vrot.slane %v257, 1
        %v259 = vmax.f32 %v257, %v258
        %v260 = vrot.slane %v225, 4
        %v261 = vmax.f32 %v225, %v260
        %v262 = vrot.slane %v261, 2
        %v263 = vmax.f32 %v261, %v262
        %v264 = vrot.slane %v263, 1
        %v265 = vmax.f32 %v263, %v264
        %v266 = vrot.slane %v228, 4
        %v267 = vmax.f32 %v228, %v266
        %v268 = vrot.slane %v267, 2
        %v269 = vmax.f32 %v267, %v268
        %v270 = vrot.slane %v269, 1
        %v271 = vmax.f32 %v269, %v270
        %v272 = vrot.slane %v231, 4
        %v273 = vmax.f32 %v231, %v272
        %v274 = vrot.slane %v273, 2
        %v275 = vmax.f32 %v273, %v274
        %v276 = vrot.slane %v275, 1
        %v277 = vmax.f32 %v275, %v276
        %v278 = vrot.slane %v234, 4
        %v279 = vmax.f32 %v234, %v278
        %v280 = vrot.slane %v279, 2
        %v281 = vmax.f32 %v279, %v280
        %v282 = vrot.slane %v281, 1
        %v283 = vmax.f32 %v281, %v282
        %vm292 = vcmask 1041409
        %v293 = vsel %vm292, %v247, %v241
        %vm294 = vcmask 1042434
        %v295 = vsel %vm294, %v253, %v293
        %vm296 = vcmask 1043459
        %v297 = vsel %vm296, %v259, %v295
        %vm298 = vcmask 1044484
        %v299 = vsel %vm298, %v265, %v297
        %vm300 = vcmask 1045509
        %v301 = vsel %vm300, %v271, %v299
        %vm302 = vcmask 1046534
        %v303 = vsel %vm302, %v277, %v301
        %vm304 = vcmask 1047559
        %v305 = vsel %vm304, %v283, %v303
        %v307 = vmax.f32 %v235, %v305
        %v308 = vsub.f32 %v235, %v307
        %v309 = vmul.f32 %v308, 1.442695
        %v310 = vpow.pop %v309
        %v312 = vcombine.high %v307, %v307
        %v314 = vunpack.c.l.s4 1966171168
        %v315 = vunpack.c.0.s8 %v314
        %v316 = vlaneseq
        %v317 = vshrl.u32 %v316, 7
        %v318 = vsub.s32 %v315, %v317
        %v319 = vrot.slane %v307, %v318
        %v321 = vunpack.c.l.s4 1966171168
        %v322 = vunpack.c.0.s8 %v321
        %v323 = vlaneseq
        %v324 = vshrl.u32 %v323, 7
        %v325 = vsub.s32 %v322, %v324
        %v326 = vrot.slane %v312, %v325
        %v327 = vcombine.high %v319, %v319
        %v328 = vcombine.high %v326, %v326
        %v330 = vunpack.c.l.s4 1966171168
        %v331 = vunpack.c.0.s8 %v330
        %v332 = vlaneseq
        %v333 = vshrl.u32 %v332, 7
        %v334 = vsub.s32 %v331, %v333
        %v335 = vrot.slane %v319, %v334
        %v337 = vunpack.c.l.s4 1966171168
        %v338 = vunpack.c.0.s8 %v337
        %v339 = vlaneseq
        %v340 = vshrl.u32 %v339, 7
        %v341 = vsub.s32 %v338, %v340
        %v342 = vrot.slane %v326, %v341
        %v344 = vunpack.c.l.s4 1966171168
        %v345 = vunpack.c.0.s8 %v344
        %v346 = vlaneseq
        %v347 = vshrl.u32 %v346, 7
        %v348 = vsub.s32 %v345, %v347
        %v349 = vrot.slane %v327, %v348
        %v351 = vunpack.c.l.s4 1966171168
        %v352 = vunpack.c.0.s8 %v351
        %v353 = vlaneseq
        %v354 = vshrl.u32 %v353, 7
        %v355 = vsub.s32 %v352, %v354
        %v356 = vrot.slane %v328, %v355
        %v357 = vcombine.high %v335, %v335
        %v358 = vcombine.high %v342, %v342
        %v359 = vcombine.high %v349, %v349
        %v360 = vcombine.high %v356, %v356
        %v361 = vlaneseq
        %v362 = vshrl.u32 %v361, 7
        %v363 = vsub.s32 0, %v362
        %v364 = vrot.slane %v335, %v363
        %v365 = vlaneseq
        %v366 = vshrl.u32 %v365, 7
        %v367 = vsub.s32 0, %v366
        %v368 = vrot.slane %v349, %v367
        %v369 = vlaneseq
        %v370 = vshrl.u32 %v369, 7
        %v371 = vsub.s32 0, %v370
        %v372 = vrot.slane %v357, %v371
        %v373 = vlaneseq
        %v374 = vshrl.u32 %v373, 7
        %v375 = vsub.s32 0, %v374
        %v376 = vrot.slane %v359, %v375
        %v377 = vlaneseq
        %v378 = vshrl.u32 %v377, 7
        %v379 = vsub.s32 0, %v378
        %v380 = vrot.slane %v342, %v379
        %v381 = vlaneseq
        %v382 = vshrl.u32 %v381, 7
        %v383 = vsub.s32 0, %v382
        %v384 = vrot.slane %v356, %v383
        %v385 = vlaneseq
        %v386 = vshrl.u32 %v385, 7
        %v387 = vsub.s32 0, %v386
        %v388 = vrot.slane %v358, %v387
        %v389 = vlaneseq
        %v390 = vshrl.u32 %v389, 7
        %v391 = vsub.s32 0, %v390
        %v392 = vrot.slane %v360, %v391
        %v401 = vsub.f32 %v213, %v364
        %v402 = vsub.f32 %v216, %v368
        %v403 = vsub.f32 %v219, %v372
        %v404 = vsub.f32 %v222, %v376
        %v405 = vsub.f32 %v225, %v380
        %v406 = vsub.f32 %v228, %v384
        %v407 = vsub.f32 %v231, %v388
        %v408 = vsub.f32 %v234, %v392
        %v409 = vmul.f32 %v401, 1.442695
        %v410 = vpow.pop %v409
        %v411 = vmul.f32 %v402, 1.442695
        %v412 = vpow.pop %v411
        %v413 = vmul.f32 %v403, 1.442695
        %v414 = vpow.pop %v413
        %v415 = vmul.f32 %v404, 1.442695
        %v416 = vpow.pop %v415
        %v417 = vmul.f32 %v405, 1.442695
        %v418 = vpow.pop %v417
        %v419 = vmul.f32 %v406, 1.442695
        %v420 = vpow.pop %v419
        %v421 = vmul.f32 %v407, 1.442695
        %v422 = vpow.pop %v421
        %v423 = vmul.f32 %v408, 1.442695
        %v424 = vpow.pop %v423
        %426 = vset.pattern.permute.xlu0 0
        %427 = vperm.xlu0 %426, %v410
        %v428 = vpop.permute.xlu0 %427
        %431 = vset.pattern.permute.xlu0 0
        %432 = vperm.xlu0 %431, %v412
        %v433 = vpop.permute.xlu0 %432
        %436 = vset.pattern.permute.xlu0 0
        %437 = vperm.xlu0 %436, %v414
        %v438 = vpop.permute.xlu0 %437
        %441 = vset.pattern.permute.xlu0 0
        %442 = vperm.xlu0 %441, %v416
        %v443 = vpop.permute.xlu0 %442
        %446 = vset.pattern.permute.xlu0 0
        %447 = vperm.xlu0 %446, %v418
        %v448 = vpop.permute.xlu0 %447
        %451 = vset.pattern.permute.xlu0 0
        %452 = vperm.xlu0 %451, %v420
        %v453 = vpop.permute.xlu0 %452
        %456 = vset.pattern.permute.xlu0 0
        %457 = vperm.xlu0 %456, %v422
        %v458 = vpop.permute.xlu0 %457
        %461 = vset.pattern.permute.xlu0 0
        %462 = vperm.xlu0 %461, %v424
        %v463 = vpop.permute.xlu0 %462
        %v465 = vmul.f32 %v428, %v188
        %v466 = vmul.f32 %v433, %v189
        %v467 = vmul.f32 %v438, %v190
        %v468 = vmul.f32 %v443, %v191
        %v469 = vmul.f32 %v448, %v192
        %v470 = vmul.f32 %v453, %v193
        %v471 = vmul.f32 %v458, %v194
        %v472 = vmul.f32 %v463, %v195
        %v473 = vsel %vm210, %v465, 0.0
        %v474 = vrot.slane %v473, 4
        %v475 = vadd.f32 %v473, %v474
        %v476 = vrot.slane %v475, 2
        %v477 = vadd.f32 %v475, %v476
        %v478 = vrot.slane %v477, 1
        %v479 = vadd.f32 %v477, %v478
        %v480 = vsel %vm210, %v466, 0.0
        %v481 = vrot.slane %v480, 4
        %v482 = vadd.f32 %v480, %v481
        %v483 = vrot.slane %v482, 2
        %v484 = vadd.f32 %v482, %v483
        %v485 = vrot.slane %v484, 1
        %v486 = vadd.f32 %v484, %v485
        %v487 = vsel %vm210, %v467, 0.0
        %v488 = vrot.slane %v487, 4
        %v489 = vadd.f32 %v487, %v488
        %v490 = vrot.slane %v489, 2
        %v491 = vadd.f32 %v489, %v490
        %v492 = vrot.slane %v491, 1
        %v493 = vadd.f32 %v491, %v492
        %v494 = vsel %vm210, %v468, 0.0
        %v495 = vrot.slane %v494, 4
        %v496 = vadd.f32 %v494, %v495
        %v497 = vrot.slane %v496, 2
        %v498 = vadd.f32 %v496, %v497
        %v499 = vrot.slane %v498, 1
        %v500 = vadd.f32 %v498, %v499
        %v501 = vsel %vm210, %v469, 0.0
        %v502 = vrot.slane %v501, 4
        %v503 = vadd.f32 %v501, %v502
        %v504 = vrot.slane %v503, 2
        %v505 = vadd.f32 %v503, %v504
        %v506 = vrot.slane %v505, 1
        %v507 = vadd.f32 %v505, %v506
        %v508 = vsel %vm210, %v470, 0.0
        %v509 = vrot.slane %v508, 4
        %v510 = vadd.f32 %v508, %v509
        %v511 = vrot.slane %v510, 2
        %v512 = vadd.f32 %v510, %v511
        %v513 = vrot.slane %v512, 1
        %v514 = vadd.f32 %v512, %v513
        %v515 = vsel %vm210, %v471, 0.0
        %v516 = vrot.slane %v515, 4
        %v517 = vadd.f32 %v515, %v516
        %v518 = vrot.slane %v517, 2
        %v519 = vadd.f32 %v517, %v518
        %v520 = vrot.slane %v519, 1
        %v521 = vadd.f32 %v519, %v520
        %v522 = vsel %vm210, %v472, 0.0
        %v523 = vrot.slane %v522, 4
        %v524 = vadd.f32 %v522, %v523
        %v525 = vrot.slane %v524, 2
        %v526 = vadd.f32 %v524, %v525
        %v527 = vrot.slane %v526, 1
        %v528 = vadd.f32 %v526, %v527
        %v529 = vld [vmem:[#allocation3] sm:$0xff]
        %v530 = vmul.f32 %v310, %v529
        %vm531 = vcmask 7168
        %v532 = vsel %vm531, %v410, 0.0
        %v533 = vrot.slane %v532, 4
        %v534 = vadd.f32 %v532, %v533
        %v535 = vrot.slane %v534, 2
        %v536 = vadd.f32 %v534, %v535
        %v537 = vrot.slane %v536, 1
        %v538 = vadd.f32 %v536, %v537
        %v539 = vsel %vm531, %v412, 0.0
        %v540 = vrot.slane %v539, 4
        %v541 = vadd.f32 %v539, %v540
        %v542 = vrot.slane %v541, 2
        %v543 = vadd.f32 %v541, %v542
        %v544 = vrot.slane %v543, 1
        %v545 = vadd.f32 %v543, %v544
        %v546 = vsel %vm531, %v414, 0.0
        %v547 = vrot.slane %v546, 4
        %v548 = vadd.f32 %v546, %v547
        %v549 = vrot.slane %v548, 2
        %v550 = vadd.f32 %v548, %v549
        %v551 = vrot.slane %v550, 1
        %v552 = vadd.f32 %v550, %v551
        %v553 = vsel %vm531, %v416, 0.0
        %v554 = vrot.slane %v553, 4
        %v555 = vadd.f32 %v553, %v554
        %v556 = vrot.slane %v555, 2
        %v557 = vadd.f32 %v555, %v556
        %v558 = vrot.slane %v557, 1
        %v559 = vadd.f32 %v557, %v558
        %v560 = vsel %vm531, %v418, 0.0
        %v561 = vrot.slane %v560, 4
        %v562 = vadd.f32 %v560, %v561
        %v563 = vrot.slane %v562, 2
        %v564 = vadd.f32 %v562, %v563
        %v565 = vrot.slane %v564, 1
        %v566 = vadd.f32 %v564, %v565
        %v567 = vsel %vm531, %v420, 0.0
        %v568 = vrot.slane %v567, 4
        %v569 = vadd.f32 %v567, %v568
        %v570 = vrot.slane %v569, 2
        %v571 = vadd.f32 %v569, %v570
        %v572 = vrot.slane %v571, 1
        %v573 = vadd.f32 %v571, %v572
        %v574 = vsel %vm531, %v422, 0.0
        %v575 = vrot.slane %v574, 4
        %v576 = vadd.f32 %v574, %v575
        %v577 = vrot.slane %v576, 2
        %v578 = vadd.f32 %v576, %v577
        %v579 = vrot.slane %v578, 1
        %v580 = vadd.f32 %v578, %v579
        %v581 = vsel %vm531, %v424, 0.0
        %v582 = vrot.slane %v581, 4
        %v583 = vadd.f32 %v581, %v582
        %v584 = vrot.slane %v583, 2
        %v585 = vadd.f32 %v583, %v584
        %v586 = vrot.slane %v585, 1
        %v587 = vadd.f32 %v585, %v586
        %v596 = vsel %vm292, %v545, %v538
        %v597 = vsel %vm294, %v552, %v596
        %v598 = vsel %vm296, %v559, %v597
        %v599 = vsel %vm298, %v566, %v598
        %v600 = vsel %vm300, %v573, %v599
        %v601 = vsel %vm302, %v580, %v600
        %v602 = vsel %vm304, %v587, %v601
        %v604 = vadd.f32 %v530, %v602
        %605 = vst.msk [vmem:[#allocation3] sm:$0xff] %vm531, %v604
        %v606 = vld [vmem:[#allocation4] sm:$0xff]
        %608 = vset.pattern.permute.xlu0 0
        %609 = vperm.xlu0 %608, %v310
        %v610 = vpop.permute.xlu0 %609
        %v612 = vmul.f32 %v610, %v606
        %v621 = vsel %vm292, %v486, %v479
        %v622 = vsel %vm294, %v493, %v621
        %v623 = vsel %vm296, %v500, %v622
        %v624 = vsel %vm298, %v507, %v623
        %v625 = vsel %vm300, %v514, %v624
        %v626 = vsel %vm302, %v521, %v625
        %v627 = vsel %vm304, %v528, %v626
        %v629 = vadd.f32 %v612, %v627
        %630 = vst.msk [vmem:[#allocation4] sm:$0xff] %vm210, %v629
        %631 = vst.msk [vmem:[#allocation2] sm:$0xff] %vm531, %v307
        // Predicated region
        $region37: #{attention_layer.1} parent=27 // pred_check
          %p632 = pneg %p178
        $region38: #{attention_layer.1} parent=27 // pred_check_branch
          %634 = sbr.rel (%p632) target = $region40
        $region39: #{attention_layer.1} parent=27 // pred_region
          %v635 = vld [vmem:[#allocation3] sm:$0xff]
          %v636 = vrcp.pop %v635
          %v637 = vmul.f32 %v635, %v636
          %v638 = vsub.f32 2.0, %v637
          %v639 = vmul.f32 %v636, %v638
          %v640 = vld [vmem:[#allocation4] sm:$0xff]
          %642 = vset.pattern.permute.xlu0 0
          %643 = vperm.xlu0 %642, %v639
          %v644 = vpop.permute.xlu0 %643
          %v646 = vmul.f32 %v640, %v644
          %647 = vst.msk [vmem:[%s176] sm:$0xff] %vm210, %v646
        $region40: #{attention_layer.1} parent=27 // pred_fallthru
          _
        %s648 = sand.u32 %s88, 1
        %s649 = scalar_lea.sflag [#allocation7], %s648
        %s650 = sand.u32 %s88, 1
        %s651 = smul.addr %s650, 8
        %s652 = scalar_lea.vmem [#allocation8], %s651
        // Predicated region
        $region41: #{attention_layer.1} parent=27 // pred_check
          %p653 = pneg %p98
        $region42: #{attention_layer.1} parent=27 // pred_check_branch
          %655 = sbr.rel (%p653) target = $region44
        $region43: #{attention_layer.1} parent=27 // pred_region
          %s657 = ssub.s32 128, 128
          %658 = vsyncadd %s649, %s657
          %s659 = smul.addr %s23, 128
          %s660 = scalar_lea.hbm %s2, %s659
          %s662 = sshll.u32 %s652, 4
          %s663 = int_to_ptr.vmem [resolvable:$true] %s662
          %665 = dma.vmem_to_hbm [thread:$0]  %s663, 128, %s660, %s649
        $region44: #{attention_layer.1} parent=27 // pred_fallthru
          _
      $region28: #{attention_layer.1} parent=5 // pred_fallthru
        _
      %p666 = scmp.le.s32.totalorder 2, %s14
      // Predicated region
      $region45: #{attention_layer.1} parent=5 // pred_check
        %p667 = pneg %p666
      $region46: #{attention_layer.1} parent=5 // pred_check_branch
        %669 = sbr.rel (%p667) target = $region48
      $region47: #{attention_layer.1} parent=5 // pred_region
        %s670 = ssub.s32 %s14, 2
        // Predicated region
        $region49: #{attention_layer.1} parent=47 // pred_check
          %p671 = pneg %p104
        $region50: #{attention_layer.1} parent=47 // pred_check_branch
          %673 = sbr.rel (%p671) target = $region52
        $region51: #{attention_layer.1} parent=47 // pred_region
          %s674 = sand.u32 %s89, 1
          %s675 = scalar_lea.sflag [#allocation7], %s674
          %s676 = sand.u32 %s89, 1
          %s677 = smul.addr %s676, 8
          %s678 = scalar_lea.vmem [#allocation8], %s677
          %679 = dma.done %s675, 128
        $region52: #{attention_layer.1} parent=47 // pred_fallthru
          _
      $region48: #{attention_layer.1} parent=5 // pred_fallthru
        _
    $region6: #{attention_layer.1} parent=1 // loop_footer
      %s18 = sadd.s32 1, %s14
    $region7: #{attention_layer.1} parent=1 // loop_footer_branch
      %13 = sbr.rel target = $region3
    $region8: #{attention_layer.1} parent=1 // loop_exit
      _
    %680 = vsyncpa [#allocation6], 1
    %s681 = scalar_lea.sflag [#allocation6], 1
    %682 = vsyncpa %s681, 1
    %683 = vsyncpa [#allocation7], 1
    %s684 = scalar_lea.sflag [#allocation7], 1
    %685 = vsyncpa %s684, 1

</llo_original>
